<compile_context>
chip_gen: v7x
topology: tpu7x:2x2x1
jax: 0.10.0
libtpu: 0.0.40
codegen_flags: <defaults>
</compile_context>

<pallas_src>
import functools
import math

import jax
import jax.numpy as jnp
from jax import lax
from jax.experimental import pallas as pl
from jax.experimental.pallas import tpu as pltpu

# Tile working-set budget (double-buffered blocks + scratch) and the scoped
# VMEM limit handed to Mosaic.  40 MiB leaves headroom on v7x (64 MiB physical)
# while allowing the 1024-row / full-K tiles below on v5e/v6e as well.
_TILE_VMEM_BUDGET = 24 * 1024 * 1024
_VMEM_LIMIT = 40 * 1024 * 1024

_M_TILES = (1024, 512, 256, 128, 64, 32, 16, 8)
# Prefer 512/256 (multiples of the 256-wide MXU on v6e/v7x) before 384/128.
_N_TILES = (512, 256, 384, 128)
# Full-K contraction preferred (no K-revisit loop / accumulator round trips).
_K_TILES = (3072, 2304, 1536, 1024, 768, 512, 384, 256, 128)
_ATTN_TILES = (256, 128, 64, 32, 16, 8)


def _divisor_tiles(dim, candidates):
    cands = [c for c in candidates if dim % c == 0]
    return cands if cands else [dim]


def _fit_2d(tms, tns, est, budget=_TILE_VMEM_BUDGET):
    for tn in tns:
        for tm in tms:
            if est(tm, tn) <= budget:
                return tm, tn
    return tms[-1], tns[-1]


def _fit_3d(tms, tns, tks, est, budget=_TILE_VMEM_BUDGET):
    for tk in tks:
        for tn in tns:
            for tm in tms:
                if est(tm, tn, tk) <= budget:
                    return tm, tn, tk
    return tms[-1], tns[-1], tks[-1]


def _round_up(x, m):
    return ((x + m - 1) // m) * m


# ------------------------- tiled matmul (+bias/res/act) ---------------------

def _matmul_kernel(x_ref, w_ref, *rest, has_bias, has_residual, activation,
                   multi_k):
    idx = 0
    b_ref = r_ref = None
    if has_bias:
        b_ref = rest[idx]; idx += 1
    if has_residual:
        r_ref = rest[idx]; idx += 1
    o_ref = rest[idx]; idx += 1
    acc_ref = rest[idx] if multi_k else None

    def epilogue(acc):
        if has_bias:
            acc = acc + b_ref[...].astype(jnp.float32)
        if activation == "gelu":
            acc = jax.nn.gelu(acc, approximate=True)   # GPT-2 "gelu_new"
        if has_residual:
            acc = acc + r_ref[...].astype(jnp.float32)
        o_ref[...] = acc.astype(o_ref.dtype)

    if multi_k:
        k = pl.program_id(2)

        @pl.when(k == 0)
        def _():
            acc_ref[...] = jnp.zeros_like(acc_ref)

        acc_ref[...] += jnp.dot(x_ref[...], w_ref[...],
                                preferred_element_type=jnp.float32)

        @pl.when(k == pl.num_programs(2) - 1)
        def _():
            epilogue(acc_ref[...])
    else:
        epilogue(jnp.dot(x_ref[...], w_ref[...],
                         preferred_element_type=jnp.float32))


def matmul(x, w, *, bias=None, residual=None, activation=None, out_dtype=None):
    """Tiled  out = act(x @ W (+ b)) (+ residual)  with f32 accumulation.

    x: [M, K];  w: [K, N];  bias: [1, N] f32;  residual: [M, N].
    """
    M, K = x.shape
    K2, N = w.shape
    assert K == K2
    out_dtype = x.dtype if out_dtype is None else out_dtype
    xb = x.dtype.itemsize
    wb = w.dtype.itemsize
    ob = jnp.dtype(out_dtype).itemsize
    rb = residual.dtype.itemsize if residual is not None else 0

    def est(tm, tn, tk):
        b = 2 * tm * tk * xb + 2 * tk * tn * wb + 2 * tm * tn * ob
        b += tm * tn * 4                       # f32 accumulator scratch
        if bias is not None:
            b += 2 * tn * 4
        if residual is not None:
            b += 2 * tm * tn * rb
        return b

    tm, tn, tk = _fit_3d(_divisor_tiles(M, _M_TILES),
                         _divisor_tiles(N, _N_TILES),
                         _divisor_tiles(K, _K_TILES), est)
    multi_k = (K // tk) > 1

    if multi_k:
        grid = (M // tm, N // tn, K // tk)
        x_spec = pl.BlockSpec((tm, tk), lambda i, j, k: (i, k))
        w_spec = pl.BlockSpec((tk, tn), lambda i, j, k: (k, j))
        b_spec = pl.BlockSpec((1, tn), lambda i, j, k: (0, j))
        r_spec = pl.BlockSpec((tm, tn), lambda i, j, k: (i, j))
        o_spec = pl.BlockSpec((tm, tn), lambda i, j, k: (i, j))
        scratch = [pltpu.VMEM((tm, tn), jnp.float32)]
        dims = ("parallel", "parallel", "arbitrary")
    else:
        grid = (M // tm, N // tn)
        x_spec = pl.BlockSpec((tm, K), lambda i, j: (i, 0))
        w_spec = pl.BlockSpec((K, tn), lambda i, j: (0, j))
        b_spec = pl.BlockSpec((1, tn), lambda i, j: (0, j))
        r_spec = pl.BlockSpec((tm, tn), lambda i, j: (i, j))
        o_spec = pl.BlockSpec((tm, tn), lambda i, j: (i, j))
        scratch = []
        dims = ("parallel", "parallel")

    in_specs = [x_spec, w_spec]
    args = [x, w]
    if bias is not None:
        in_specs.append(b_spec); args.append(bias)
    if residual is not None:
        in_specs.append(r_spec); args.append(residual)

    # TODO(synk): try pipeline_mode=pl.Buffered(3) on the weight BlockSpec for
    # the weight-streaming (MLP / LM-head) matmuls once verified on this JAX
    # version; expected only a few percent.
    kernel = functools.partial(
        _matmul_kernel, has_bias=bias is not None,
        has_residual=residual is not None, activation=activation,
        multi_k=multi_k)

    return pl.pallas_call(
        kernel,
        out_shape=jax.ShapeDtypeStruct((M, N), out_dtype),
        grid=grid,
        in_specs=in_specs,
        out_specs=o_spec,
        scratch_shapes=scratch,
        compiler_params=pltpu.CompilerParams(
            dimension_semantics=dims, vmem_limit_bytes=_VMEM_LIMIT),
    )(*args)


# ----------------------- fused LayerNorm -> matmul ---------------------------

def _ln_matmul_kernel(x_ref, g_ref, bta_ref, w_ref, *rest, eps, activation,
                      has_bias):
    if has_bias:
        b_ref, o_ref, y_ref = rest
    else:
        b_ref = None
        o_ref, y_ref = rest

    j = pl.program_id(1)

    # LayerNorm the (tm, K) row block once per row tile and reuse across the
    # N tiles (j axis) via a VMEM scratch in the matmul input dtype.
    @pl.when(j == 0)
    def _():
        x = x_ref[...].astype(jnp.float32)
        mu = jnp.mean(x, axis=-1, keepdims=True)
        xc = x - mu
        var = jnp.mean(xc * xc, axis=-1, keepdims=True)
        y = xc * lax.rsqrt(var + eps)
        y_ref[...] = (y * g_ref[...] + bta_ref[...]).astype(y_ref.dtype)

    acc = jnp.dot(y_ref[...], w_ref[...], preferred_element_type=jnp.float32)
    if has_bias:
        acc = acc + b_ref[...].astype(jnp.float32)
    if activation == "gelu":
        acc = jax.nn.gelu(acc, approximate=True)
    o_ref[...] = acc.astype(o_ref.dtype)


def ln_matmul(x, gamma, beta, w, bias=None, *, activation=None, eps=1e-5,
              out_dtype=None):
    """out = act(LayerNorm(x) @ W (+ b)); full-K blocks (LN needs whole rows)."""
    M, K = x.shape
    N = w.shape[1]
    out_dtype = x.dtype if out_dtype is None else out_dtype
    xb = x.dtype.itemsize
    wb = w.dtype.itemsize
    ob = jnp.dtype(out_dtype).itemsize

    def est(tm, tn):
        b = 2 * tm * K * xb                    # x block (resident across j)
        b += tm * K * wb                       # LayerNorm'd scratch
        b += 2 * K * tn * wb + 2 * tm * tn * ob
        b += 4 * K * 4                         # gamma / beta
        if bias is not None:
            b += 2 * tn * 4
        return b

    tm, tn = _fit_2d(_divisor_tiles(M, _M_TILES),
                     _divisor_tiles(N, _N_TILES), est)
    grid = (M // tm, N // tn)

    in_specs = [
        pl.BlockSpec((tm, K), lambda i, j: (i, 0)),
        pl.BlockSpec((1, K), lambda i, j: (0, 0)),
        pl.BlockSpec((1, K), lambda i, j: (0, 0)),
        pl.BlockSpec((K, tn), lambda i, j: (0, j)),
    ]
    args = [x, gamma, beta, w]
    if bias is not None:
        in_specs.append(pl.BlockSpec((1, tn), lambda i, j: (0, j)))
        args.append(bias)

    kernel = functools.partial(_ln_matmul_kernel, eps=eps,
                               activation=activation,
                               has_bias=bias is not None)
    return pl.pallas_call(
        kernel,
        out_shape=jax.ShapeDtypeStruct((M, N), out_dtype),
        grid=grid,
        in_specs=in_specs,
        out_specs=pl.BlockSpec((tm, tn), lambda i, j: (i, j)),
        scratch_shapes=[pltpu.VMEM((tm, K), w.dtype)],
        compiler_params=pltpu.CompilerParams(
            # j must be "arbitrary": the LN scratch carries across N tiles.
            dimension_semantics=("parallel", "arbitrary"),
            vmem_limit_bytes=_VMEM_LIMIT),
    )(*args)


# -------------------- flash-style causal attention ---------------------------

def _flash_attn_kernel(q_ref, k_ref, v_ref, o_ref, m_ref, l_ref, acc_ref, *,
                       n_head, d_head, scale, tq, tkv):
    qi = pl.program_id(1)
    ki = pl.program_id(2)
    q_off = qi * tq
    k_off = ki * tkv

    @pl.when(ki == 0)
    def _():
        m_ref[...] = jnp.full_like(m_ref, -jnp.inf)
        l_ref[...] = jnp.zeros_like(l_ref)
        acc_ref[...] = jnp.zeros_like(acc_ref)

    # Skip kv blocks that are entirely above the causal diagonal.
    @pl.when(k_off <= q_off + (tq - 1))
    def _():
        q = q_ref[0]        # [tq, D]  (all heads packed on the lane axis)
        k = k_ref[0]        # [tkv, D]
        v = v_ref[0]        # [tkv, D]
        row = q_off + lax.broadcasted_iota(jnp.int32, (tq, tkv), 0)
        col = k_off + lax.broadcasted_iota(jnp.int32, (tq, tkv), 1)
        causal = col <= row
        # TODO(synk): process heads in pairs so the acc column stores are
        # 128-lane aligned (d_head=64 on real GPT-2 -> masked 64-lane stores).
        for h in range(n_head):
            hs = slice(h * d_head, (h + 1) * d_head)
            # fold 1/sqrt(d_head) into q (a [tq, d_head] operand, not the
            # [tq, tkv] f32 score matrix)
            qh = (q[:, hs].astype(jnp.float32) * scale).astype(q.dtype)
            s = lax.dot_general(qh, k[:, hs], (((1,), (1,)), ((), ())),
                                preferred_element_type=jnp.float32)
            s = jnp.where(causal, s, -1e30)
            m_prev = m_ref[h]                                   # [tq, 1]
            m_new = jnp.maximum(m_prev, jnp.max(s, axis=-1, keepdims=True))
            alpha = jnp.exp(m_prev - m_new)
            p = jnp.exp(s - m_new)
            l_ref[h] = alpha * l_ref[h] + jnp.sum(p, axis=-1, keepdims=True)
            acc_ref[:, hs] = alpha * acc_ref[:, hs] + jnp.dot(
                p.astype(v.dtype), v[:, hs],
                preferred_element_type=jnp.float32)
            m_ref[h] = m_new

    @pl.when(ki == pl.num_programs(2) - 1)
    def _():
        for h in range(n_head):
            hs = slice(h * d_head, (h + 1) * d_head)
            acc_ref[:, hs] = acc_ref[:, hs] / l_ref[h]   # exact division
        o_ref[0] = acc_ref[...].astype(o_ref.dtype)


def causal_attention(qkv, *, n_head, seq_len, out_dtype=None):
    """qkv: [B*T, 3D] slab straight from the QKV projection -> attn [B*T, D]."""
    M, threeD = qkv.shape
    D = threeD // 3
    d_head = D // n_head
    T = seq_len
    B = M // T
    scale = 1.0 / math.sqrt(d_head)
    tq = _divisor_tiles(T, _ATTN_TILES)[0]
    tkv = tq

    qkv3 = qkv.reshape(B, T, threeD)   # free reshape; heads stay packed
    kernel = functools.partial(_flash_attn_kernel, n_head=n_head,
                               d_head=d_head, scale=scale, tq=tq, tkv=tkv)
    out = pl.pallas_call(
        kernel,
        out_shape=jax.ShapeDtypeStruct(
            (B, T, D), qkv.dtype if out_dtype is None else out_dtype),
        grid=(B, T // tq, T // tkv),
        in_specs=[
            # Q / K / V are column block-slices of the same [B, T, 3D] slab.
            pl.BlockSpec((1, tq, D), lambda b, qi, ki: (b, qi, 0)),
            pl.BlockSpec((1, tkv, D), lambda b, qi, ki: (b, ki, 1)),
            pl.BlockSpec((1, tkv, D), lambda b, qi, ki: (b, ki, 2)),
        ],
        out_specs=pl.BlockSpec((1, tq, D), lambda b, qi, ki: (b, qi, 0)),
        scratch_shapes=[
            pltpu.VMEM((n_head, tq, 1), jnp.float32),   # running max
            pltpu.VMEM((n_head, tq, 1), jnp.float32),   # running sum
            pltpu.VMEM((tq, D), jnp.float32),           # per-head acc, packed
        ],
        compiler_params=pltpu.CompilerParams(
            # b / q-block parallel -> megacore sharding on v7x; kv arbitrary.
            dimension_semantics=("parallel", "parallel", "arbitrary"),
            vmem_limit_bytes=_VMEM_LIMIT),
    )(qkv3, qkv3, qkv3)
    return out.reshape(M, D)


# ----------------------------- model (glue) ---------------------------------

def init_params(key, *, vocab, max_pos, d_model, n_head, n_layer, d_mlp,
                param_dtype=jnp.bfloat16):
    std = 0.02
    ks = jax.random.split(key, 2 + n_layer)

    def w(k, shape):
        return (std * jax.random.normal(k, shape, jnp.float32)).astype(param_dtype)

    params = {
        "wte": w(ks[0], (vocab, d_model)),
        "wpe": w(ks[1], (max_pos, d_model)),
        "ln_f_g": jnp.ones((1, d_model), jnp.float32),
        "ln_f_b": jnp.zeros((1, d_model), jnp.float32),
        "blocks": [],
    }
    for i in range(n_layer):
        bk = jax.random.split(ks[2 + i], 4)
        params["blocks"].append({
            "ln1_g": jnp.ones((1, d_model), jnp.float32),
            "ln1_b": jnp.zeros((1, d_model), jnp.float32),
            "w_qkv": w(bk[0], (d_model, 3 * d_model)),
            "b_qkv": jnp.zeros((1, 3 * d_model), jnp.float32),
            "w_proj": w(bk[1], (d_model, d_model)),
            "b_proj": jnp.zeros((1, d_model), jnp.float32),
            "ln2_g": jnp.ones((1, d_model), jnp.float32),
            "ln2_b": jnp.zeros((1, d_model), jnp.float32),
            "w_fc": w(bk[2], (d_model, d_mlp)),
            "b_fc": jnp.zeros((1, d_mlp), jnp.float32),
            "w_out": w(bk[3], (d_mlp, d_model)),
            "b_out": jnp.zeros((1, d_model), jnp.float32),
        })
    return params


def learner_forward(params, input_ids, *, n_head):
    """Equivalent of Learner.forward(input_ids) -> LM logits [B, T, vocab]."""
    B, T = input_ids.shape
    vocab, D = params["wte"].shape

    # token + position embedding (XLA gather glue)
    # TODO(synk): fold the wte row gather (scalar prefetch of input_ids) and
    # the wpe add into the first block's LN->QKV kernel to drop one [B*T, D]
    # activation round trip (matters most on v5e).
    tok = jnp.take(params["wte"], input_ids, axis=0)            # [B, T, D] bf16
    pos = params["wpe"][:T][None, :, :]
    h = (tok.astype(jnp.float32) + pos.astype(jnp.float32))
    h = h.astype(params["wte"].dtype).reshape(B * T, D)         # [B*T, D] bf16

    for blk in params["blocks"]:
        # fused LN -> QKV projection (bias fused), heads stay packed in the slab
        qkv = ln_matmul(h, blk["ln1_g"], blk["ln1_b"], blk["w_qkv"], blk["b_qkv"])
        # flash-style causal MHA reading heads out of the [B*T, 3D] slab
        attn = causal_attention(qkv, n_head=n_head, seq_len=T)  # [B*T, D]
        # output projection: bias + residual add fused into the matmul epilogue
        h = matmul(attn, blk["w_proj"], bias=blk["b_proj"], residual=h)

        # fused LN -> FC (+GELU), then out-projection with fused residual
        m = ln_matmul(h, blk["ln2_g"], blk["ln2_b"], blk["w_fc"], blk["b_fc"],
                      activation="gelu")
        h = matmul(m, blk["w_out"], bias=blk["b_out"], residual=h)

    # Tied LM head fused with the final LayerNorm.  The head weight is padded
    # along vocab to a lane-dense multiple of 512 and pre-arranged as [D, V]
    # (done once per forward here; in a serving path do it at load time), so
    # the MXU sees [tk, tn] blocks with no per-block transpose and the N
    # tiling never falls back to the full (unpadded) vocab width.
    vocab_pad = _round_up(vocab, 512)
    wte = params["wte"]
    if vocab_pad != vocab:
        wte = jnp.pad(wte, ((0, vocab_pad - vocab), (0, 0)))
    lm_w = wte.T                                                # [D, vocab_pad]
    logits = ln_matmul(h, params["ln_f_g"], params["ln_f_b"], lm_w, None,
                       out_dtype=jnp.float32)                   # [B*T, vocab_pad]
    return logits[:, :vocab].reshape(B, T, vocab)

# TODO(synk): Learner's optimizer/scheduler/DataLoader machinery (AdamW, linear
# warmup schedule, grad clipping, fit loops) is training infrastructure, not
# forward-pass compute, and is intentionally not ported to Pallas.


# ------------------------- pure-JAX reference (f32) --------------------------

def reference_forward(params, input_ids, *, n_head):
    f32 = jnp.float32
    B, T = input_ids.shape
    D = params["wte"].shape[1]
    Dh = D // n_head
    wte = params["wte"].astype(f32)
    wpe = params["wpe"].astype(f32)

    def ln(x, g, b, eps=1e-5):
        mu = jnp.mean(x, -1, keepdims=True)
        var = jnp.mean((x - mu) ** 2, -1, keepdims=True)
        return (x - mu) * lax.rsqrt(var + eps) * g + b

    h = (jnp.take(wte, input_ids, axis=0) + wpe[:T][None]).reshape(B * T, D)
    for blk in params["blocks"]:
        a_in = ln(h, blk["ln1_g"], blk["ln1_b"])
        qkv = a_in @ blk["w_qkv"].astype(f32) + blk["b_qkv"]
        q, k, v = jnp.split(qkv, 3, axis=-1)

        def heads(x):
            return x.reshape(B, T, n_head, Dh).transpose(0, 2, 1, 3)

        q, k, v = heads(q), heads(k), heads(v)
        s = jnp.einsum("bhqd,bhkd->bhqk", q, k) / math.sqrt(Dh)
        mask = jnp.tril(jnp.ones((T, T), bool))
        s = jnp.where(mask, s, -1e30)
        p = jax.nn.softmax(s, axis=-1)
        attn = jnp.einsum("bhqk,bhkd->bhqd", p, v)
        attn = attn.transpose(0, 2, 1, 3).reshape(B * T, D)
        h = h + attn @ blk["w_proj"].astype(f32) + blk["b_proj"]
        m_in = ln(h, blk["ln2_g"], blk["ln2_b"])
        m = jax.nn.gelu(m_in @ blk["w_fc"].astype(f32) + blk["b_fc"],
                        approximate=True)
        h = h + m @ blk["w_out"].astype(f32) + blk["b_out"]
    h = ln(h, params["ln_f_g"], params["ln_f_b"])
    return (h @ wte.T).reshape(B, T, -1)


if __name__ == "__main__":
    VOCAB, MAX_POS = 256, 64
    D_MODEL, N_HEAD, N_LAYER, D_MLP = 128, 4, 2, 512
    B, T = 2, 16

    key = jax.random.PRNGKey(0)
    pkey, dkey = jax.random.split(key)
    params = init_params(pkey, vocab=VOCAB, max_pos=MAX_POS, d_model=D_MODEL,
                         n_head=N_HEAD, n_layer=N_LAYER, d_mlp=D_MLP)
    input_ids = jax.random.randint(dkey, (B, T), 0, VOCAB, dtype=jnp.int32)

    logits = learner_forward(params, input_ids, n_head=N_HEAD)
    logits = jax.block_until_ready(logits)
    assert logits.shape == (B, T, VOCAB)
    assert bool(jnp.all(jnp.isfinite(logits)))

    ref = reference_forward(params, input_ids, n_head=N_HEAD)
    err = float(jnp.max(jnp.abs(logits - ref)))
    assert err < 1e-1, f"max |logits - ref| = {err}"
    print("KERNEL_OK")
</pallas_src>

<mosaic_0001>
module attributes {stable_mosaic.version = 11 : i64} {
  func.func @_ln_matmul_kernel(%arg0: i32, %arg1: i32, %arg2: memref<32x128xbf16, #tpu.memory_space<vmem>>, %arg3: memref<1x128xf32, #tpu.memory_space<vmem>>, %arg4: memref<1x128xf32, #tpu.memory_space<vmem>>, %arg5: memref<128x384xbf16, #tpu.memory_space<vmem>>, %arg6: memref<1x384xf32, #tpu.memory_space<vmem>>, %arg7: memref<32x384xbf16, #tpu.memory_space<vmem>>, %arg8: memref<32x128xbf16, #tpu.memory_space<vmem>>) attributes {dimension_semantics = [#tpu.dimension_semantics<parallel>, #tpu.dimension_semantics<arbitrary>], iteration_bounds = array<i64: 1, 1>, scalar_prefetch = 0 : i64, scratch_operands = 1 : i64, tpu.core_type = #tpu.core_type<tc>, window_params = [{transform_indices = @transform_0, window_bounds = array<i64: 32, 128>}, {pipeline_mode = #tpu.pipeline_mode<synchronous>, transform_indices = @transform_1, window_bounds = array<i64: 1, 128>}, {pipeline_mode = #tpu.pipeline_mode<synchronous>, transform_indices = @transform_2, window_bounds = array<i64: 1, 128>}, {transform_indices = @transform_3, window_bounds = array<i64: 128, 384>}, {transform_indices = @transform_4, window_bounds = array<i64: 1, 384>}, {transform_indices = @transform_5, window_bounds = array<i64: 32, 384>}]} {
    %c0_i32 = arith.constant 0 : i32
    %0 = arith.cmpi eq, %arg1, %c0_i32 : i32
    %1 = arith.extui %0 : i1 to i32
    %c0_i32_0 = arith.constant 0 : i32
    %2 = arith.cmpi ne, %1, %c0_i32_0 : i32
    scf.if %2 {
      %c0_8 = arith.constant 0 : index
      %c0_9 = arith.constant 0 : index
      %11 = vector.load %arg2[%c0_8, %c0_9] : memref<32x128xbf16, #tpu.memory_space<vmem>>, vector<32x128xbf16>
      %12 = arith.extf %11 : vector<32x128xbf16> to vector<32x128xf32>
      %cst_10 = arith.constant dense<0.000000e+00> : vector<32xf32>
      %13 = vector.multi_reduction <add>, %12, %cst_10 [1] : vector<32x128xf32> to vector<32xf32>
      %14 = vector.shape_cast %13 : vector<32xf32> to vector<32x1xf32>
      %cst_11 = arith.constant 1.280000e+02 : f32
      %15 = vector.broadcast %cst_11 : f32 to vector<32x1xf32>
      %16 = arith.divf %14, %15 : vector<32x1xf32>
      %17 = vector.broadcast %16 : vector<32x1xf32> to vector<32x128xf32>
      %18 = arith.subf %12, %17 : vector<32x128xf32>
      %19 = arith.mulf %18, %18 : vector<32x128xf32>
      %cst_12 = arith.constant dense<0.000000e+00> : vector<32xf32>
      %20 = vector.multi_reduction <add>, %19, %cst_12 [1] : vector<32x128xf32> to vector<32xf32>
      %21 = vector.shape_cast %20 : vector<32xf32> to vector<32x1xf32>
      %cst_13 = arith.constant 1.280000e+02 : f32
      %22 = vector.broadcast %cst_13 : f32 to vector<32x1xf32>
      %23 = arith.divf %21, %22 : vector<32x1xf32>
      %cst_14 = arith.constant 9.99999974E-6 : f32
      %24 = vector.broadcast %cst_14 : f32 to vector<32x1xf32>
      %25 = arith.addf %23, %24 : vector<32x1xf32>
      %26 = math.rsqrt %25 : vector<32x1xf32>
      %27 = vector.broadcast %26 : vector<32x1xf32> to vector<32x128xf32>
      %28 = arith.mulf %18, %27 : vector<32x128xf32>
      %c0_15 = arith.constant 0 : index
      %c0_16 = arith.constant 0 : index
      %29 = vector.load %arg3[%c0_15, %c0_16] : memref<1x128xf32, #tpu.memory_space<vmem>>, vector<1x128xf32>
      %30 = vector.broadcast %29 : vector<1x128xf32> to vector<32x128xf32>
      %31 = arith.mulf %28, %30 : vector<32x128xf32>
      %c0_17 = arith.constant 0 : index
      %c0_18 = arith.constant 0 : index
      %32 = vector.load %arg4[%c0_17, %c0_18] : memref<1x128xf32, #tpu.memory_space<vmem>>, vector<1x128xf32>
      %33 = vector.broadcast %32 : vector<1x128xf32> to vector<32x128xf32>
      %34 = arith.addf %31, %33 : vector<32x128xf32>
      %35 = arith.truncf %34 : vector<32x128xf32> to vector<32x128xbf16>
      %c0_19 = arith.constant 0 : index
      %c0_20 = arith.constant 0 : index
      %36 = vector.load %arg8[%c0_19, %c0_20] : memref<32x128xbf16, #tpu.memory_space<vmem>>, vector<32x128xbf16>
      tpu.vector_store %arg8[%c0_19, %c0_20], %35 {strides = array<i32>} : memref<32x128xbf16, #tpu.memory_space<vmem>>, vector<32x128xbf16>,
    } else {
    }
    %c0 = arith.constant 0 : index
    %c0_1 = arith.constant 0 : index
    %3 = vector.load %arg8[%c0, %c0_1] : memref<32x128xbf16, #tpu.memory_space<vmem>>, vector<32x128xbf16>
    %c0_2 = arith.constant 0 : index
    %c0_3 = arith.constant 0 : index
    %4 = vector.load %arg5[%c0_2, %c0_3] : memref<128x384xbf16, #tpu.memory_space<vmem>>, vector<128x384xbf16>
    %cst = arith.constant dense<0.000000e+00> : vector<32x384xf32>
    %5 = tpu.matmul %3, %4, %cst {dimension_numbers = #tpu.dot_dimension_numbers<[1], [0], [0], [1], [0, 0, 1, 1], [], []>} : vector<32x128xbf16>, vector<128x384xbf16>, vector<32x384xf32> -> vector<32x384xf32>
    %c0_4 = arith.constant 0 : index
    %c0_5 = arith.constant 0 : index
    %6 = vector.load %arg6[%c0_4, %c0_5] : memref<1x384xf32, #tpu.memory_space<vmem>>, vector<1x384xf32>
    %7 = vector.broadcast %6 : vector<1x384xf32> to vector<32x384xf32>
    %8 = arith.addf %5, %7 : vector<32x384xf32>
    %9 = arith.truncf %8 : vector<32x384xf32> to vector<32x384xbf16>
    %c0_6 = arith.constant 0 : index
    %c0_7 = arith.constant 0 : index
    %10 = vector.load %arg7[%c0_6, %c0_7] : memref<32x384xbf16, #tpu.memory_space<vmem>>, vector<32x384xbf16>
    tpu.vector_store %arg7[%c0_6, %c0_7], %9 {strides = array<i32>} : memref<32x384xbf16, #tpu.memory_space<vmem>>, vector<32x384xbf16>,
    return
  }
  func.func @transform_0(%arg0: i32, %arg1: i32) -> (i32, i32) {
    %c0_i32 = arith.constant 0 : i32
    %c0_i32_0 = arith.constant 0 : i32
    return %arg0, %c0_i32 : i32, i32
  }
  func.func @transform_1(%arg0: i32, %arg1: i32) -> (i32, i32) {
    %c0_i32 = arith.constant 0 : i32
    %c0_i32_0 = arith.constant 0 : i32
    %c0_i32_1 = arith.constant 0 : i32
    return %c0_i32, %c0_i32_0 : i32, i32
  }
  func.func @transform_2(%arg0: i32, %arg1: i32) -> (i32, i32) {
    %c0_i32 = arith.constant 0 : i32
    %c0_i32_0 = arith.constant 0 : i32
    %c0_i32_1 = arith.constant 0 : i32
    return %c0_i32, %c0_i32_0 : i32, i32
  }
  func.func @transform_3(%arg0: i32, %arg1: i32) -> (i32, i32) {
    %c0_i32 = arith.constant 0 : i32
    %c0_i32_0 = arith.constant 0 : i32
    return %c0_i32, %arg1 : i32, i32
  }
  func.func @transform_4(%arg0: i32, %arg1: i32) -> (i32, i32) {
    %c0_i32 = arith.constant 0 : i32
    %c0_i32_0 = arith.constant 0 : i32
    return %c0_i32, %arg1 : i32, i32
  }
  func.func @transform_5(%arg0: i32, %arg1: i32) -> (i32, i32) {
    %c0_i32 = arith.constant 0 : i32
    return %arg0, %arg1 : i32, i32
  }
}

</mosaic_0001>

<llo_original>
// kernel: tpu_custom_call.1
$region0: #{tpu_custom_call.1}
  #allocation0 [shape = 'u32[]', space=smem, size = 0x4, offset = 0x4, fixed_abs, tag = 'smem constant byte address 0x4 - core index']
  #allocation1 [shape = 'u32[144,128]{1,0:T(1,128)}', space=vmem, size = 0x12000, scoped, tag = 'internal scratch']
  #allocation2 [shape = 'bf16[32,128]{1,0:T(16,128)(2,1)}', space=vmem, size = 0x2000, scoped, tag = 'scratch operand']
  %s0 = inlined_call_operand.hbm [shape: bf16[32,128], index: 0, kind: input, shape index: {}]
  %s1 = inlined_call_operand.vmem [shape: f32[1,128], index: 1, kind: input, shape index: {}]
  %s2 = inlined_call_operand.vmem [shape: f32[1,128], index: 2, kind: input, shape index: {}]
  %s3 = inlined_call_operand.hbm [shape: bf16[128,384], index: 3, kind: input, shape index: {}]
  %s4 = inlined_call_operand.vmem [shape: f32[1,384], index: 4, kind: input, shape index: {}]
  %s5 = inlined_call_operand.hbm [shape: bf16[32,384], index: 5, kind: output, shape index: {}]
  %s6 = sld [smem:[#allocation0]]
  $region42: #{tpu_custom_call.1} parent=0
    _
  %s8 = ssub.s32 1, %s6
  %s9 = scalar_select 0, %s8, %s6
  $region1: #{tpu_custom_call.1} parent=0
    #allocation3 [shape = 'u8[8192]{0}', space=vmem, size = 0x2000, scoped, tag = 'input window, operand 0, single buffered']
    #allocation4 [shape = 's32[1]{0}', space=sflag, size = 0x4, scoped, tag = 'scoped memory for tpu_custom_call.1']
    #allocation5 [shape = 's32[1]{0}', space=sflag, size = 0x4, scoped, tag = 'scoped memory for tpu_custom_call.1']
    #allocation6 [shape = 'u8[98304]{0}', space=vmem, size = 0x18000, scoped, tag = 'input window, operand 3, single buffered']
    #allocation7 [shape = 's32[1]{0}', space=sflag, size = 0x4, scoped, tag = 'scoped memory for tpu_custom_call.1']
    #allocation8 [shape = 'u8[24576]{0}', space=vmem, size = 0x6000, scoped, tag = 'output window, operand 0, single buffered']
    %10 = vsyncpa [#allocation4], 0
    %11 = vsyncpa [#allocation7], 0
    %12 = vsyncpa [#allocation5], 0
    // Predicated region
    $region2: #{tpu_custom_call.1} parent=1 // pred_check
      _
    $region3: #{tpu_custom_call.1} parent=1 // pred_check_branch
      %14 = sbr.rel (0) target = $region5
    $region4: #{tpu_custom_call.1} parent=1 // pred_region
      %s16 = ssub.s32 256, 256
      %17 = vsyncadd [#allocation4], %s16
      %s18 = sshll.u32 [#allocation3], 4
      %s19 = int_to_ptr.vmem [resolvable:$true] %s18
      %24 = dma.hbm_to_vmem [thread:$0]  %s0, 256, %s19, [#allocation4], 64, 64, 4
    $region5: #{tpu_custom_call.1} parent=1 // pred_fallthru
      _
    // Predicated region
    $region6: #{tpu_custom_call.1} parent=1 // pred_check
      _
    $region7: #{tpu_custom_call.1} parent=1 // pred_check_branch
      %26 = sbr.rel (0) target = $region9
    $region8: #{tpu_custom_call.1} parent=1 // pred_region
      _
    $region9: #{tpu_custom_call.1} parent=1 // pred_fallthru
      _
    // Predicated region
    $region10: #{tpu_custom_call.1} parent=1 // pred_check
      _
    $region11: #{tpu_custom_call.1} parent=1 // pred_check_branch
      %28 = sbr.rel (0) target = $region13
    $region12: #{tpu_custom_call.1} parent=1 // pred_region
      _
    $region13: #{tpu_custom_call.1} parent=1 // pred_fallthru
      _
    // Predicated region
    $region14: #{tpu_custom_call.1} parent=1 // pred_check
      _
    $region15: #{tpu_custom_call.1} parent=1 // pred_check_branch
      %30 = sbr.rel (0) target = $region17
    $region16: #{tpu_custom_call.1} parent=1 // pred_region
      %s32 = ssub.s32 3072, 3072
      %33 = vsyncadd [#allocation7], %s32
      %s34 = sshll.u32 [#allocation6], 4
      %s35 = int_to_ptr.vmem [resolvable:$true] %s34
      %40 = dma.hbm_to_vmem [thread:$0]  %s3, 3072, %s35, [#allocation7], 192, 192, 12
    $region17: #{tpu_custom_call.1} parent=1 // pred_fallthru
      _
    // Predicated region
    $region18: #{tpu_custom_call.1} parent=1 // pred_check
      _
    $region19: #{tpu_custom_call.1} parent=1 // pred_check_branch
      %42 = sbr.rel (0) target = $region21
    $region20: #{tpu_custom_call.1} parent=1 // pred_region
      _
    $region21: #{tpu_custom_call.1} parent=1 // pred_fallthru
      _
    // Predicated region
    $region22: #{tpu_custom_call.1} parent=1 // pred_check
      _
    $region23: #{tpu_custom_call.1} parent=1 // pred_check_branch
      %44 = sbr.rel (0) target = $region25
    $region24: #{tpu_custom_call.1} parent=1 // pred_region
      %45 = dma.done [#allocation4], 256
    $region25: #{tpu_custom_call.1} parent=1 // pred_fallthru
      _
    // Predicated region
    $region26: #{tpu_custom_call.1} parent=1 // pred_check
      _
    $region27: #{tpu_custom_call.1} parent=1 // pred_check_branch
      %47 = sbr.rel (0) target = $region29
    $region28: #{tpu_custom_call.1} parent=1 // pred_region
      %48 = dma.done [#allocation7], 3072
    $region29: #{tpu_custom_call.1} parent=1 // pred_fallthru
      _
    %p50 = scmp.eq.s32.totalorder 0, 0
    // Predicated region
    $region30: #{tpu_custom_call.1} parent=1 // pred_check
      %p51 = pneg %p50
    $region31: #{tpu_custom_call.1} parent=1 // pred_check_branch
      %53 = sbr.rel (%p51) target = $region33
    $region32: #{tpu_custom_call.1} parent=1 // pred_region
      %v54 = vld [vmem:[#allocation3] sm:$0xf]
      %v55 = vld [vmem:[#allocation3 + $0x4] sm:$0xf]
      %v56 = vld [vmem:[#allocation3 + $0x8] sm:$0xf]
      %v57 = vld [vmem:[#allocation3 + $0xc] sm:$0xf]
      %v58 = vunpack.c.l.bf16 %v54
      %v59 = vunpack.c.l.bf16 %v55
      %v60 = vunpack.c.l.bf16 %v56
      %v61 = vunpack.c.l.bf16 %v57
      %62 = vadd.xlane.f32.xlu0 %v58
      %v63 = vpop.xlane.xlu0 %62
      %64 = vadd.xlane.f32.xlu0 %v59
      %v65 = vpop.xlane.xlu0 %64
      %66 = vadd.xlane.f32.xlu0 %v60
      %v67 = vpop.xlane.xlu0 %66
      %68 = vadd.xlane.f32.xlu0 %v61
      %v69 = vpop.xlane.xlu0 %68
      %v70 = vrcp.pop 128.0
      %v71 = vmul.f32 %v63, %v70
      %v72 = vmul.f32 %v65, %v70
      %v73 = vmul.f32 %v67, %v70
      %v74 = vmul.f32 %v69, %v70
      %v75 = vsub.f32 %v58, %v71
      %v76 = vsub.f32 %v59, %v72
      %v77 = vsub.f32 %v60, %v73
      %v78 = vsub.f32 %v61, %v74
      %v79 = vmul.f32 %v75, %v75
      %v80 = vmul.f32 %v76, %v76
      %v81 = vmul.f32 %v77, %v77
      %v82 = vmul.f32 %v78, %v78
      %83 = vadd.xlane.f32.xlu0 %v79
      %v84 = vpop.xlane.xlu0 %83
      %85 = vadd.xlane.f32.xlu0 %v80
      %v86 = vpop.xlane.xlu0 %85
      %87 = vadd.xlane.f32.xlu0 %v81
      %v88 = vpop.xlane.xlu0 %87
      %89 = vadd.xlane.f32.xlu0 %v82
      %v90 = vpop.xlane.xlu0 %89
      %v91 = vmul.f32 %v84, %v70
      %v92 = vmul.f32 %v86, %v70
      %v93 = vmul.f32 %v88, %v70
      %v94 = vmul.f32 %v90, %v70
      %v95 = vadd.f32 %v91, 1e-05
      %v96 = vadd.f32 %v92, 1e-05
      %v97 = vadd.f32 %v93, 1e-05
      %v98 = vadd.f32 %v94, 1e-05
      %v99 = vrsqrt.pop %v95
      %v100 = vrsqrt.pop %v96
      %v101 = vrsqrt.pop %v97
      %v102 = vrsqrt.pop %v98
      %v103 = vmul.f32 %v75, %v99
      %v104 = vmul.f32 %v76, %v100
      %v105 = vmul.f32 %v77, %v101
      %v106 = vmul.f32 %v78, %v102
      %v107 = vld [vmem:[%s1] sm:$0x1]
      %v109 = vlaneseq
      %v110 = vshrl.u32 %v109, 7
      %v111 = vsub.s32 0, %v110
      %v112 = vrot.slane %v107, %v111
      %v114 = vmul.f32 %v103, %v112
      %v115 = vmul.f32 %v104, %v112
      %v116 = vmul.f32 %v105, %v112
      %v117 = vmul.f32 %v106, %v112
      %v118 = vld [vmem:[%s2] sm:$0x1]
      %v120 = vlaneseq
      %v121 = vshrl.u32 %v120, 7
      %v122 = vsub.s32 0, %v121
      %v123 = vrot.slane %v118, %v122
      %v125 = vadd.f32 %v114, %v123
      %v126 = vadd.f32 %v115, %v123
      %v127 = vadd.f32 %v116, %v123
      %v128 = vadd.f32 %v117, %v123
      %v129 = vpack.c.bf16 %v126, %v125
      %v130 = vpack.c.bf16 %v128, %v127
      %131 = vst [vmem:[#allocation2] sm:$0xff] %v129
      %132 = vst [vmem:[#allocation2 + $0x8] sm:$0xff] %v130
    $region33: #{tpu_custom_call.1} parent=1 // pred_fallthru
      _
    %v133 = vld [vmem:[#allocation2] sm:$0xff]
    %v134 = vld [vmem:[#allocation2 + $0x8] sm:$0xff]
    %v135 = vld [vmem:[#allocation6] sm:$0xff]
    %v136 = vld [vmem:[#allocation6 + $0x8] sm:$0xf]
    %v137 = vld [vmem:[#allocation6 + $0xc] sm:$0xff]
    %v138 = vld [vmem:[#allocation6 + $0x14] sm:$0xf]
    %v139 = vld [vmem:[#allocation6 + $0x18] sm:$0xff]
    %v140 = vld [vmem:[#allocation6 + $0x20] sm:$0xf]
    %v141 = vld [vmem:[#allocation6 + $0x24] sm:$0xff]
    %v142 = vld [vmem:[#allocation6 + $0x2c] sm:$0xf]
    %v143 = vld [vmem:[#allocation6 + $0x30] sm:$0xff]
    %v144 = vld [vmem:[#allocation6 + $0x38] sm:$0xf]
    %v145 = vld [vmem:[#allocation6 + $0x3c] sm:$0xff]
    %v146 = vld [vmem:[#allocation6 + $0x44] sm:$0xf]
    %v147 = vld [vmem:[#allocation6 + $0x48] sm:$0xff]
    %v148 = vld [vmem:[#allocation6 + $0x50] sm:$0xf]
    %v149 = vld [vmem:[#allocation6 + $0x54] sm:$0xff]
    %v150 = vld [vmem:[#allocation6 + $0x5c] sm:$0xf]
    %v151 = vld [vmem:[#allocation6 + $0x60] sm:$0xff]
    %v152 = vld [vmem:[#allocation6 + $0x68] sm:$0xf]
    %v153 = vld [vmem:[#allocation6 + $0x6c] sm:$0xff]
    %v154 = vld [vmem:[#allocation6 + $0x74] sm:$0xf]
    %v155 = vld [vmem:[#allocation6 + $0x78] sm:$0xff]
    %v156 = vld [vmem:[#allocation6 + $0x80] sm:$0xf]
    %v157 = vld [vmem:[#allocation6 + $0x84] sm:$0xff]
    %v158 = vld [vmem:[#allocation6 + $0x8c] sm:$0xf]
    %v159 = vld [vmem:[#allocation6 + $0x90] sm:$0xff]
    %v160 = vld [vmem:[#allocation6 + $0x98] sm:$0xf]
    %v161 = vld [vmem:[#allocation6 + $0x9c] sm:$0xff]
    %v162 = vld [vmem:[#allocation6 + $0xa4] sm:$0xf]
    %v163 = vld [vmem:[#allocation6 + $0xa8] sm:$0xff]
    %v164 = vld [vmem:[#allocation6 + $0xb0] sm:$0xf]
    %v165 = vld [vmem:[#allocation6 + $0xb4] sm:$0xff]
    %v166 = vld [vmem:[#allocation6 + $0xbc] sm:$0xf]
    %v167 = vld [vmem:[%s4] sm:$0x7]
    %v169 = vlaneseq
    %v170 = vshrl.u32 %v169, 7
    %v171 = vsub.s32 0, %v170
    %v172 = vrot.slane %v167, %v171
    %v173 = vlaneseq
    %v174 = vshrl.u32 %v173, 7
    %v175 = vsub.s32 1, %v174
    %v176 = vrot.slane %v167, %v175
    %v177 = vlaneseq
    %v178 = vshrl.u32 %v177, 7
    %v179 = vsub.s32 2, %v178
    %v180 = vrot.slane %v167, %v179
    %v216 = vunpack.c.l.b16 %v135
    %v217 = vunpack.c.h.b16 %v135
    %v218 = vunpack.c.l.b16 %v136
    %v219 = vunpack.c.l.b16 %v137
    %v220 = vunpack.c.h.b16 %v137
    %v221 = vunpack.c.l.b16 %v138
    %v222 = vunpack.c.l.b16 %v139
    %v223 = vunpack.c.h.b16 %v139
    %v224 = vunpack.c.l.b16 %v140
    %v225 = vunpack.c.l.b16 %v141
    %v226 = vunpack.c.h.b16 %v141
    %v227 = vunpack.c.l.b16 %v142
    %v228 = vunpack.c.l.b16 %v143
    %v229 = vunpack.c.h.b16 %v143
    %v230 = vunpack.c.l.b16 %v144
    %v231 = vunpack.c.l.b16 %v145
    %v232 = vunpack.c.h.b16 %v145
    %v233 = vunpack.c.l.b16 %v146
    %v234 = vunpack.c.l.b16 %v147
    %v235 = vunpack.c.h.b16 %v147
    %v236 = vunpack.c.l.b16 %v148
    %v237 = vunpack.c.l.b16 %v149
    %v238 = vunpack.c.h.b16 %v149
    %v239 = vunpack.c.l.b16 %v150
    %v240 = vunpack.c.l.b16 %v151
    %v241 = vunpack.c.h.b16 %v151
    %v242 = vunpack.c.l.b16 %v152
    %v243 = vunpack.c.l.b16 %v153
    %v244 = vunpack.c.h.b16 %v153
    %v245 = vunpack.c.l.b16 %v154
    %v246 = vunpack.c.l.b16 %v155
    %v247 = vunpack.c.h.b16 %v155
    %v248 = vunpack.c.l.b16 %v156
    %v249 = vunpack.c.l.b16 %v157
    %v250 = vunpack.c.h.b16 %v157
    %v251 = vunpack.c.l.b16 %v158
    %v252 = vunpack.c.l.b16 %v159
    %v253 = vunpack.c.h.b16 %v159
    %v254 = vunpack.c.l.b16 %v160
    %v255 = vunpack.c.l.b16 %v161
    %v256 = vunpack.c.h.b16 %v161
    %v257 = vunpack.c.l.b16 %v162
    %v258 = vunpack.c.l.b16 %v163
    %v259 = vunpack.c.h.b16 %v163
    %v260 = vunpack.c.l.b16 %v164
    %v261 = vunpack.c.l.b16 %v165
    %v262 = vunpack.c.h.b16 %v165
    %v263 = vunpack.c.l.b16 %v166
    %v264 = vpack.c.b16 %v219, %v216
    %v265 = vpack.c.b16 %v220, %v217
    %v266 = vpack.c.b16 %v221, %v218
    %v267 = vpack.c.b16 %v225, %v222
    %v268 = vpack.c.b16 %v226, %v223
    %v269 = vpack.c.b16 %v227, %v224
    %v270 = vpack.c.b16 %v231, %v228
    %v271 = vpack.c.b16 %v232, %v229
    %v272 = vpack.c.b16 %v233, %v230
    %v273 = vpack.c.b16 %v237, %v234
    %v274 = vpack.c.b16 %v238, %v235
    %v275 = vpack.c.b16 %v239, %v236
    %v276 = vpack.c.b16 %v243, %v240
    %v277 = vpack.c.b16 %v244, %v241
    %v278 = vpack.c.b16 %v245, %v242
    %v279 = vpack.c.b16 %v249, %v246
    %v280 = vpack.c.b16 %v250, %v247
    %v281 = vpack.c.b16 %v251, %v248
    %v282 = vpack.c.b16 %v255, %v252
    %v283 = vpack.c.b16 %v256, %v253
    %v284 = vpack.c.b16 %v257, %v254
    %v285 = vpack.c.b16 %v261, %v258
    %v286 = vpack.c.b16 %v262, %v259
    %v287 = vpack.c.b16 %v263, %v260
    %312 = vmatprep.subr.bf16.mxu0 %v265
    %313 = vmatpush1.bf16.msra.mxu0 %v264
    %314 = vmatprep.subr.bf16.mxu0 %v268
    %315 = vmatpush1.bf16.msra.mxu0 %v267
    %316 = vmatprep.subr.bf16.mxu0 %v271
    %317 = vmatpush1.bf16.msra.mxu0 %v270
    %318 = vmatprep.subr.bf16.mxu0 %v274
    %319 = vmatpush1.bf16.msra.mxu0 %v273
    %320 = vmatprep.subr.bf16.mxu0 %v277
    %321 = vmatpush1.bf16.msra.mxu0 %v276
    %322 = vmatprep.subr.bf16.mxu0 %v280
    %323 = vmatpush1.bf16.msra.mxu0 %v279
    %324 = vmatprep.subr.bf16.mxu0 %v283
    %325 = vmatpush1.bf16.msra.mxu0 %v282
    %326 = vmatprep.subr.bf16.mxu0 %v286
    %327 = vmatpush1.bf16.msra.mxu0 %v285
    %328 = vmatprep.subr.bf16.mxu0 0
    %329 = vmatpush1.bf16.msra.mxu0 0
    %330 = vmatprep.subr.bf16.mxu0 0
    %331 = vmatpush1.bf16.msra.mxu0 0
    %332 = vmatprep.subr.bf16.mxu0 0
    %333 = vmatpush1.bf16.msra.mxu0 0
    %334 = vmatprep.subr.bf16.mxu0 0
    %335 = vmatpush1.bf16.msra.mxu0 0
    %336 = vmatprep.subr.bf16.mxu0 0
    %337 = vmatpush1.bf16.msra.mxu0 0
    %338 = vmatprep.subr.bf16.mxu0 0
    %339 = vmatpush1.bf16.msra.mxu0 0
    %340 = vmatprep.subr.bf16.mxu0 0
    %341 = vmatpush1.bf16.msra.mxu0 0
    %342 = vmatprep.subr.bf16.mxu0 0
    %343 = vmatpush1.bf16.msra.mxu0 0
    %344 = vmatprep.mubr.bf16.mxu0 0
    %345 = vmatmul.mubr.bf16.gmra.mrb[0].mxu0 %v133
    %v346 = vpop.f32.mrb[0].mxu0
    %v347 = vadd.f32 %v172, %v346
    %v348 = vpop.f32.mrb[0].mxu0
    %v349 = vadd.f32 %v176, %v348
    %v350 = vpop.f32.mrb[0].mxu0
    %v351 = vadd.f32 %v172, %v350
    %v352 = vpop.f32.mrb[0].mxu0
    %v353 = vadd.f32 %v176, %v352
    %354 = vmatprep.mubr.bf16.mxu0 0
    %355 = vmatmul.mubr.bf16.gmra.mrb[0].mxu0 %v134
    %v356 = vpop.f32.mrb[0].mxu0
    %v357 = vadd.f32 %v172, %v356
    %v358 = vpop.f32.mrb[0].mxu0
    %v359 = vadd.f32 %v176, %v358
    %v360 = vpop.f32.mrb[0].mxu0
    %v361 = vadd.f32 %v172, %v360
    %v362 = vpop.f32.mrb[0].mxu0
    %v363 = vadd.f32 %v176, %v362
    %364 = vdwg.mxu0
    %365 = vmatprep.subr.bf16.mxu0 0
    %366 = vmatpush1.bf16.msra.mxu0 %v266
    %367 = vmatprep.subr.bf16.mxu0 0
    %368 = vmatpush1.bf16.msra.mxu0 %v269
    %369 = vmatprep.subr.bf16.mxu0 0
    %370 = vmatpush1.bf16.msra.mxu0 %v272
    %371 = vmatprep.subr.bf16.mxu0 0
    %372 = vmatpush1.bf16.msra.mxu0 %v275
    %373 = vmatprep.subr.bf16.mxu0 0
    %374 = vmatpush1.bf16.msra.mxu0 %v278
    %375 = vmatprep.subr.bf16.mxu0 0
    %376 = vmatpush1.bf16.msra.mxu0 %v281
    %377 = vmatprep.subr.bf16.mxu0 0
    %378 = vmatpush1.bf16.msra.mxu0 %v284
    %379 = vmatprep.subr.bf16.mxu0 0
    %380 = vmatpush1.bf16.msra.mxu0 %v287
    %381 = vmatprep.subr.bf16.mxu0 0
    %382 = vmatpush1.bf16.msra.mxu0 0
    %383 = vmatprep.subr.bf16.mxu0 0
    %384 = vmatpush1.bf16.msra.mxu0 0
    %385 = vmatprep.subr.bf16.mxu0 0
    %386 = vmatpush1.bf16.msra.mxu0 0
    %387 = vmatprep.subr.bf16.mxu0 0
    %388 = vmatpush1.bf16.msra.mxu0 0
    %389 = vmatprep.subr.bf16.mxu0 0
    %390 = vmatpush1.bf16.msra.mxu0 0
    %391 = vmatprep.subr.bf16.mxu0 0
    %392 = vmatpush1.bf16.msra.mxu0 0
    %393 = vmatprep.subr.bf16.mxu0 0
    %394 = vmatpush1.bf16.msra.mxu0 0
    %395 = vmatprep.subr.bf16.mxu0 0
    %396 = vmatpush1.bf16.msra.mxu0 0
    %397 = vmatprep.mubr.bf16.mxu0 0
    %398 = vmatmul.mubr.bf16.gmra.mrb[0].mxu0 %v133
    %v399 = vpop.f32.mrb[0].mxu0
    %v400 = vadd.f32 %v180, %v399
    %v401 = vpop.f32.mrb[0].mxu0
    %v402 = vpop.f32.mrb[0].mxu0
    %v403 = vadd.f32 %v180, %v402
    %v404 = vpop.f32.mrb[0].mxu0
    %405 = vmatprep.mubr.bf16.mxu0 0
    %406 = vmatmul.mubr.bf16.gmra.mrb[0].mxu0 %v134
    %v407 = vpop.f32.mrb[0].mxu0
    %v408 = vadd.f32 %v180, %v407
    %v409 = vpop.f32.mrb[0].mxu0
    %v410 = vpop.f32.mrb[0].mxu0
    %v411 = vadd.f32 %v180, %v410
    %v412 = vpop.f32.mrb[0].mxu0
    %413 = vdwg.mxu0
    %v414 = vpack.c.bf16 %v351, %v347
    %v415 = vpack.c.bf16 %v353, %v349
    %v416 = vpack.c.bf16 %v403, %v400
    %v417 = vpack.c.bf16 %v361, %v357
    %v418 = vpack.c.bf16 %v363, %v359
    %v419 = vpack.c.bf16 %v411, %v408
    %v426 = vunpack.c.l.b16 %v414
    %v427 = vunpack.c.l.b16 %v415
    %v428 = vunpack.c.l.b16 %v416
    %v429 = vunpack.c.h.b16 %v414
    %v430 = vunpack.c.h.b16 %v415
    %v431 = vunpack.c.h.b16 %v416
    %v432 = vunpack.c.l.b16 %v417
    %v433 = vunpack.c.l.b16 %v418
    %v434 = vunpack.c.l.b16 %v419
    %v435 = vunpack.c.h.b16 %v417
    %v436 = vunpack.c.h.b16 %v418
    %v437 = vunpack.c.h.b16 %v419
    %v438 = vpack.c.b16 %v427, %v426
    %v439 = vpack.c.b16 %v428, %v428
    %v440 = vpack.c.b16 %v430, %v429
    %v441 = vpack.c.b16 %v431, %v431
    %v442 = vpack.c.b16 %v433, %v432
    %v443 = vpack.c.b16 %v434, %v434
    %v444 = vpack.c.b16 %v436, %v435
    %v445 = vpack.c.b16 %v437, %v437
    %454 = vst [vmem:[#allocation8] sm:$0xff] %v438
    %455 = vst [vmem:[#allocation8 + $0x8] sm:$0xf] %v439
    %456 = vst [vmem:[#allocation8 + $0xc] sm:$0xff] %v440
    %457 = vst [vmem:[#allocation8 + $0x14] sm:$0xf] %v441
    %458 = vst [vmem:[#allocation8 + $0x18] sm:$0xff] %v442
    %459 = vst [vmem:[#allocation8 + $0x20] sm:$0xf] %v443
    %460 = vst [vmem:[#allocation8 + $0x24] sm:$0xff] %v444
    %461 = vst [vmem:[#allocation8 + $0x2c] sm:$0xf] %v445
    // Predicated region
    $region34: #{tpu_custom_call.1} parent=1 // pred_check
      _
    $region35: #{tpu_custom_call.1} parent=1 // pred_check_branch
      %463 = sbr.rel (0) target = $region37
    $region36: #{tpu_custom_call.1} parent=1 // pred_region
      %s465 = ssub.s32 768, 768
      %466 = vsyncadd [#allocation5], %s465
      %s467 = sshll.u32 [#allocation8], 4
      %s468 = int_to_ptr.vmem [resolvable:$true] %s467
      %473 = dma.vmem_to_hbm [thread:$0]  %s468, 768, %s5, [#allocation5], 192, 192, 12
    $region37: #{tpu_custom_call.1} parent=1 // pred_fallthru
      _
    // Predicated region
    $region38: #{tpu_custom_call.1} parent=1 // pred_check
      _
    $region39: #{tpu_custom_call.1} parent=1 // pred_check_branch
      %475 = sbr.rel (0) target = $region41
    $region40: #{tpu_custom_call.1} parent=1 // pred_region
      %476 = dma.done [#allocation5], 768
    $region41: #{tpu_custom_call.1} parent=1 // pred_fallthru
      _
    %477 = vsyncpa [#allocation4], 1
    %478 = vsyncpa [#allocation7], 1
    %479 = vsyncpa [#allocation5], 1

</llo_original>
